<compile_context>
chip_gen: v6e
topology: v6e:2x2x1
jax: 0.10.0
libtpu: 0.0.40
codegen_flags: <defaults>
</compile_context>

<pallas_src>
import functools

import jax
import jax.numpy as jnp
import numpy as np
from jax import lax
from jax.experimental import pallas as pl
from jax.experimental.pallas import tpu as pltpu

# bf16 MXU inputs (f32 accumulation) — single-pass MXU on v5e/v6e/v7x.
_MXU_INPUT_DTYPE = jnp.bfloat16
# Explicit scoped-VMEM budget (leaves headroom under v7x's 64 MiB physical VMEM).
_VMEM_LIMIT_BYTES = 48 * 1024 * 1024


def _pick_tile(n, target, aligns):
    """Largest tile <= target that divides n and is a multiple of one of `aligns`
    (searched in order, e.g. 256 first for the v6e/v7x 2x256^2 MXU); falls back to the
    full dimension (full-extent blocks bypass the (8,128) rule)."""
    if n <= target:
        return n
    for align in aligns:
        t = (target // align) * align
        while t >= align:
            if n % t == 0:
                return t
            t -= align
    return n


# ----------------------------------------------------------------------------
# Kernel 0: row-wise L2 normalization of a stack of feature tensors (tiled rows).
#   stack: (T, B, D) f32 -> (T, B, D) bf16   (each tensor normalized exactly once)
# ----------------------------------------------------------------------------
def _normalize_kernel(x_ref, o_ref):
    x = x_ref[...].astype(jnp.float32)                        # (1, tb, D)
    ssq = jnp.sum(x * x, axis=-1, keepdims=True)              # (1, tb, 1)
    # torch F.normalize(p=2, dim=1, eps=1e-12): x / max(||x||, 1e-12)
    inv = lax.rsqrt(jnp.maximum(ssq, 1e-24))
    o_ref[...] = (x * inv).astype(o_ref.dtype)


def normalize_stack_pallas(stack):
    t, b, d = stack.shape
    tb = _pick_tile(b, 512, aligns=(8,))
    return pl.pallas_call(
        _normalize_kernel,
        out_shape=jax.ShapeDtypeStruct((t, b, d), _MXU_INPUT_DTYPE),
        grid=(t, b // tb),
        in_specs=[pl.BlockSpec((1, tb, d), lambda i, j: (i, j, 0))],
        out_specs=pl.BlockSpec((1, tb, d), lambda i, j: (i, j, 0)),
        compiler_params=pltpu.CompilerParams(
            dimension_semantics=("parallel", "parallel"),
            vmem_limit_bytes=_VMEM_LIMIT_BYTES),
    )(stack)


# ----------------------------------------------------------------------------
# Kernel 1: tiled Barlow-Twins cross-correlation loss over ALL pairs.
#   grid=(pair, d_i, d_j); (td, td) corr blocks from (B, td) column strips; per-pair
#   scalar loss accumulated in VMEM scratch (sum((corr-I)^2 ⊙ W) =
#       lamb*sum(corr^2) + (1-lamb)*sum(diag^2) - 2*sum(diag) + D ).
# ----------------------------------------------------------------------------
def _barlip_pairs_kernel(i1_ref, i2_ref, z1_ref, z2_ref, loss_ref, acc_ref,
                         *, lamb, scale_loss, d_total, inv_n):
    del i1_ref, i2_ref                                        # consumed by index_maps
    di = pl.program_id(1)
    dj = pl.program_id(2)
    n_di = pl.num_programs(1)
    n_dj = pl.num_programs(2)

    @pl.when((di == 0) & (dj == 0))
    def _():
        acc_ref[...] = jnp.zeros_like(acc_ref)

    z1 = z1_ref[0]                                            # (B, td) bf16 strip (cols di*td..)
    z2 = z2_ref[0]                                            # (B, td) bf16 strip (cols dj*td..)
    corr = lax.dot_general(                                   # (td, td), f32 accumulation
        z1, z2, (((0,), (0,)), ((), ())), preferred_element_type=jnp.float32
    ) * inv_n
    acc_ref[...] += jnp.full(acc_ref.shape, lamb * jnp.sum(corr * corr), jnp.float32)

    @pl.when(di == dj)
    def _():
        # diag of this corr block == column-wise dot of the two strips (no iota masks).
        diag = jnp.sum(z1.astype(jnp.float32) * z2.astype(jnp.float32),
                       axis=0, keepdims=True) * inv_n         # (1, td)
        corr_d = (1.0 - lamb) * jnp.sum(diag * diag) - 2.0 * jnp.sum(diag)
        acc_ref[...] += jnp.full(acc_ref.shape, corr_d, jnp.float32)

    @pl.when((di == n_di - 1) & (dj == n_dj - 1))
    def _():
        loss_ref[0] = scale_loss * (acc_ref[...] + d_total)   # lane-broadcast scalar


def barlip_pairs_pallas(v1_stack, v2_stack, idx1, idx2, lamb, scale_loss):
    p = idx1.shape[0]
    _, b, dv = v1_stack.shape
    assert v2_stack.shape[-1] == dv, "BarLIP assumes square correlation (equal widths)"
    td = _pick_tile(dv, 512, aligns=(256, 128))
    n_d = dv // td
    kernel = functools.partial(
        _barlip_pairs_kernel, lamb=float(lamb), scale_loss=float(scale_loss),
        d_total=float(dv), inv_n=1.0 / b)
    out = pl.pallas_call(
        kernel,
        out_shape=jax.ShapeDtypeStruct((p, 1, 128), jnp.float32),
        grid_spec=pltpu.PrefetchScalarGridSpec(
            num_scalar_prefetch=2,
            grid=(p, n_d, n_d),
            in_specs=[
                # z1 strip depends only on (pair, d_i) -> no re-DMA across inner d_j
                pl.BlockSpec((1, b, td), lambda i, di, dj, i1, i2: (i1[i], 0, di)),
                pl.BlockSpec((1, b, td), lambda i, di, dj, i1, i2: (i2[i], 0, dj)),
            ],
            out_specs=pl.BlockSpec((1, 1, 128), lambda i, di, dj, i1, i2: (i, 0, 0)),
            scratch_shapes=[pltpu.VMEM((1, 128), jnp.float32)],   # per-pair loss accumulator
        ),
        compiler_params=pltpu.CompilerParams(
            dimension_semantics=("parallel", "arbitrary", "arbitrary"),
            vmem_limit_bytes=_VMEM_LIMIT_BYTES),
    )(idx1, idx2, v1_stack, v2_stack)
    return out[:, 0, 0]                                       # (num_pairs,) losses


# ----------------------------------------------------------------------------
# Kernel 2: blocked CLIP cross-entropy over ALL (image, text) pairs.
#   grid=(pair, column-block).  Per step: ONE (B, tk) MXU matmul; image->text uses
#   online-softmax row stats across blocks, text->image is exact within the block
#   (all rows present).  Diag comes from a tiny (tk, tk) band matmul.  All four
#   scalars are written to one lane-dense (1, 1, 512) output block at the last step.
# ----------------------------------------------------------------------------
def _clip_pairs_kernel(a_idx_ref, b_idx_ref, scale_ref, smooth_ref, a_ref, b_ref,
                       out_ref, m_scr, l_scr, s_scr, d_scr, lc_scr, ac_scr):
    del a_idx_ref, b_idx_ref                                  # consumed by index_maps
    pair = pl.program_id(0)
    kb = pl.program_id(1)
    n_kb = pl.num_programs(1)

    a = a_ref[0]                                              # (B, D) bf16, L2-normalized
    b_blk = b_ref[0]                                          # (tk, D) bf16, L2-normalized
    n = a.shape[0]
    tk = b_blk.shape[0]
    inv_n = 1.0 / n
    scale = scale_ref[pair]
    ls = smooth_ref[pair]

    @pl.when(kb == 0)
    def _():
        m_scr[...] = jnp.full_like(m_scr, -jnp.inf)
        l_scr[...] = jnp.zeros_like(l_scr)
        s_scr[...] = jnp.zeros_like(s_scr)
        lc_scr[...] = jnp.zeros_like(lc_scr)
        ac_scr[...] = jnp.zeros_like(ac_scr)

    # ---- one big MXU matmul per (pair, column-block): logits (B, tk) f32 ----
    logits = scale * lax.dot_general(
        a, b_blk, (((1,), (1,)), ((), ())), preferred_element_type=jnp.float32)

    # ---- diagonal band: rows off..off+tk hold this block's diagonal --------
    off = pl.multiple_of(kb * tk, tk)
    a_band = a_ref[0, pl.ds(off, tk), :]                      # (tk, D) ref-slice
    band = scale * lax.dot_general(
        a_band, b_blk, (((1,), (1,)), ((), ())), preferred_element_type=jnp.float32)
    ri = lax.broadcasted_iota(jnp.int32, band.shape, 0)
    ci = lax.broadcasted_iota(jnp.int32, band.shape, 1)
    band_diag = jnp.where(ri == ci, band, 0.0)                # only (tk, tk), not (B, tk)
    d_col = jnp.sum(band_diag, axis=1, keepdims=True)         # (tk, 1) sublane-major
    d_lane = jnp.sum(band_diag, axis=0, keepdims=True)        # (1, tk) lane-major
    d_scr[pl.ds(off, tk), :] = d_col                          # per-row diag for finalize

    # ---- image->text (row softmax): online-softmax stats across blocks -----
    m_blk = jnp.max(logits, axis=1, keepdims=True)            # (B, 1)
    m_new = jnp.maximum(m_scr[...], m_blk)
    alpha = jnp.exp(m_scr[...] - m_new)
    l_scr[...] = alpha * l_scr[...] + jnp.sum(jnp.exp(logits - m_new), axis=1, keepdims=True)
    s_scr[...] = s_scr[...] + jnp.sum(logits, axis=1, keepdims=True)
    m_scr[...] = m_new

    # ---- text->image (column softmax): exact within this block -------------
    m_c = jnp.max(logits, axis=0, keepdims=True)              # (1, tk)
    lse_c = m_c + jnp.log(jnp.sum(jnp.exp(logits - m_c), axis=0, keepdims=True))
    s_c = jnp.sum(logits, axis=0, keepdims=True)
    # (1-ls)*nll + ls*mean(-logp) summed over this block's columns
    per_c_sum = (jnp.sum(lse_c) - (1.0 - ls) * jnp.sum(d_col)
                 - (ls * inv_n) * jnp.sum(s_c))
    lc_scr[...] += jnp.full(lc_scr.shape, per_c_sum, jnp.float32)
    # NOTE: ">=" counts ties as correct (torch argmax picks the first max index).
    acc_c_cnt = jnp.sum((d_lane >= m_c).astype(jnp.float32))
    ac_scr[...] += jnp.full(ac_scr.shape, acc_c_cnt, jnp.float32)

    # ---- finalize: one wide lane-dense store of all four scalars -----------
    @pl.when(kb == n_kb - 1)
    def _():
        lse_r = m_scr[...] + jnp.log(l_scr[...])              # (B, 1)
        per_r = lse_r - (1.0 - ls) * d_scr[...] - (ls * inv_n) * s_scr[...]
        loss_r = jnp.sum(per_r) * inv_n
        acc_r = 100.0 * inv_n * jnp.sum((d_scr[...] >= m_scr[...]).astype(jnp.float32))
        out_ref[0] = jnp.concatenate(
            [jnp.full((1, 128), loss_r, jnp.float32),         # lanes   0..127: loss image->text
             lc_scr[...] * inv_n,                             # lanes 128..255: loss text->image
             jnp.full((1, 128), acc_r, jnp.float32),          # lanes 256..383: acc  image->text
             ac_scr[...] * (100.0 * inv_n)],                  # lanes 384..511: acc  text->image
            axis=-1)


def clip_pairs_pallas(img_stack, txt_stack, a_idx, b_idx, scales, smooths):
    p = a_idx.shape[0]
    _, b, d = img_stack.shape
    assert txt_stack.shape[1:] == (b, d)
    tk = _pick_tile(b, 512, aligns=(256, 128, 8))
    n_kb = b // tk
    out = pl.pallas_call(
        _clip_pairs_kernel,
        out_shape=jax.ShapeDtypeStruct((p, 1, 512), jnp.float32),
        grid_spec=pltpu.PrefetchScalarGridSpec(
            num_scalar_prefetch=2,
            grid=(p, n_kb),
            in_specs=[
                pl.BlockSpec(memory_space=pltpu.MemorySpace.SMEM),   # per-pair logit scale
                pl.BlockSpec(memory_space=pltpu.MemorySpace.SMEM),   # per-pair label smoothing
                # `a` block depends only on the pair -> no re-DMA across column blocks
                pl.BlockSpec((1, b, d), lambda i, kb, ai, bi: (ai[i], 0, 0)),
                pl.BlockSpec((1, tk, d), lambda i, kb, ai, bi: (bi[i], kb, 0)),
            ],
            out_specs=pl.BlockSpec((1, 1, 512), lambda i, kb, ai, bi: (i, 0, 0)),
            scratch_shapes=[
                pltpu.VMEM((b, 1), jnp.float32),    # m: running row max
                pltpu.VMEM((b, 1), jnp.float32),    # l: running row exp-sum
                pltpu.VMEM((b, 1), jnp.float32),    # s: running row logit-sum (smoothing)
                pltpu.VMEM((b, 1), jnp.float32),    # d: diag logit per row
                pltpu.VMEM((1, 128), jnp.float32),  # column-direction loss accumulator
                pltpu.VMEM((1, 128), jnp.float32),  # column-direction accuracy accumulator
            ],
        ),
        compiler_params=pltpu.CompilerParams(
            dimension_semantics=("parallel", "arbitrary"),
            vmem_limit_bytes=_VMEM_LIMIT_BYTES),
    )(a_idx, b_idx, scales, smooths, img_stack, txt_stack)
    return out[:, 0, 0], out[:, 0, 128], out[:, 0, 256], out[:, 0, 384]


# ----------------------------------------------------------------------------
# BarLIPLoss forward (glue in plain JAX, hot paths in the fused Pallas kernels)
# ----------------------------------------------------------------------------
class BarLIPLoss:
    def __init__(self, loss_avg_or_sum, label_smoothing, lamb=0.005, scale_loss=0.025):
        self.loss_avg_or_sum = loss_avg_or_sum
        self.label_smoothing = float(label_smoothing)
        self.lamb = float(lamb)
        self.scale_loss = float(scale_loss)

    def _clip_pairs(self, img_list, txt_list, pair_a, pair_b, scales, smooths):
        # Each tensor is L2-normalized exactly once (hoisted out of the CE kernel).
        img_stack = normalize_stack_pallas(jnp.stack(img_list))
        txt_stack = normalize_stack_pallas(jnp.stack(txt_list))
        return clip_pairs_pallas(
            img_stack, txt_stack,
            jnp.asarray(pair_a, jnp.int32), jnp.asarray(pair_b, jnp.int32),
            scales.astype(jnp.float32), jnp.asarray(smooths, jnp.float32))

    def __call__(self, outputs):
        # ---------------- BarLIP cross-correlation losses (one fused call) ----
        v_img = [outputs["v_image"]] + list(outputs["v_image_local"])
        v_txt = [outputs["v_text"]] + list(outputs["v_text_local"])
        n_vi = len(outputs["v_image_local"])
        n_vt = len(outputs["v_text_local"])
        bpairs = [(0, 0)] + [(1 + i, 1 + j) for i in range(n_vi) for j in range(n_vt)]
        # Pre-cast the raw v features to bf16 ONCE (halves HBM->VMEM traffic in the kernel).
        # NOTE: unnormalized features in bf16 may lose precision at very large widths; keep
        # the stacks f32 here if exactness vs torch matters more than bandwidth.
        v1_stack = jnp.stack(v_img).astype(_MXU_INPUT_DTYPE)
        v2_stack = jnp.stack(v_txt).astype(_MXU_INPUT_DTYPE)
        barlip_per_pair = barlip_pairs_pallas(
            v1_stack, v2_stack,
            jnp.asarray([a for a, _ in bpairs], jnp.int32),
            jnp.asarray([b for _, b in bpairs], jnp.int32),
            self.lamb, self.scale_loss)
        barlip = jnp.mean(barlip_per_pair)          # == sum / num_losses

        # ---------------- CL2L CLIP losses (one fused call when widths match) -
        z_i, z_t = outputs["z_image_global"], outputs["z_text_global"]
        h_i = list(outputs["h_image_local"])
        h_t = list(outputs["h_text_local"])
        assert len(h_i) == len(h_t)
        num_augs = len(h_i)
        logit_scale = jnp.asarray(outputs["logit_scale"], jnp.float32)
        h_logit_scale = jnp.asarray(outputs["h_logit_scale"], jnp.float32)

        prod = [(a, b) for a in range(num_augs) for b in range(num_augs)]
        same_width = num_augs == 0 or h_i[0].shape == z_i.shape
        if same_width:
            pair_a = [0] + [1 + a for a, _ in prod]
            pair_b = [0] + [1 + b for _, b in prod]
            scales = jnp.stack([logit_scale] + [h_logit_scale] * len(prod))
            smooths = [0.0] + [self.label_smoothing] * len(prod)
            lr, lc, ar, ac = self._clip_pairs(
                [z_i] + h_i, [z_t] + h_t, pair_a, pair_b, scales, smooths)
            lr_g, lc_g, ar_g, ac_g = lr[0], lc[0], ar[0], ac[0]
            lr_l, lc_l, ar_l, ac_l = lr[1:], lc[1:], ar[1:], ac[1:]
        else:
            # global / local embedding widths differ -> two fused calls
            lr, lc, ar, ac = self._clip_pairs(
                [z_i], [z_t], [0], [0], jnp.stack([logit_scale]), [0.0])
            lr_g, lc_g, ar_g, ac_g = lr[0], lc[0], ar[0], ac[0]
            lr_l = lc_l = ar_l = ac_l = None
            if num_augs > 0:
                lr_l, lc_l, ar_l, ac_l = self._clip_pairs(
                    h_i, h_t, [a for a, _ in prod], [b for _, b in prod],
                    jnp.stack([h_logit_scale] * len(prod)),
                    [self.label_smoothing] * len(prod))

        clip_loss_image_global, clip_loss_text_global = lr_g, lc_g
        clip_acc_image_global, clip_acc_text_global = ar_g, ac_g

        if num_augs > 0:
            clip_loss_image_local = jnp.mean(lr_l)
            clip_loss_text_local = jnp.mean(lc_l)
            clip_acc_image_local = jnp.mean(ar_l)
            # torch divides the text accuracy by len(image_local_logits); lengths are
            # equal here, so mean() matches (kept deliberately).
            clip_acc_text_local = jnp.mean(ac_l)
        else:
            clip_loss_image_local = clip_loss_text_local = 0.0
            clip_acc_image_local = clip_acc_text_local = 0.0

        clip_loss_image = (clip_loss_image_global + clip_loss_image_local * num_augs) / (1 + num_augs)
        clip_loss_text = (clip_loss_text_global + clip_loss_text_local * num_augs) / (1 + num_augs)
        clip_loss = (clip_loss_image + clip_loss_text) / 2
        clip_total = clip_loss * (2 if self.loss_avg_or_sum == "sum" else 1)
        loss = barlip + clip_total

        out = {
            "loss": loss,
            "barlip_loss": barlip,
            "clip_loss_image": clip_loss_image,
            "clip_loss_text": clip_loss_text,
            "clip_loss_image_global": clip_loss_image_global,
            "clip_loss_text_global": clip_loss_text_global,
            "clip_loss": clip_loss,
            "clip_acc": clip_acc_image_global,
            "clip_acc_image_global": clip_acc_image_global,
            "clip_acc_text_global": clip_acc_text_global,
            "h_logit_scale": outputs["h_logit_scale"],
        }
        if num_augs > 0:
            out.update({
                "clip_loss_image_local": clip_loss_image_local,
                "clip_loss_text_local": clip_loss_text_local,
                "clip_acc_image_local": clip_acc_image_local,
                "clip_acc_text_local": clip_acc_text_local,
            })
        return out


# ----------------------------------------------------------------------------
# Pure-JAX f32 reference (torch semantics) for a correctness spot-check
# ----------------------------------------------------------------------------
def _normalize_ref(x):
    return x / jnp.maximum(jnp.linalg.norm(x, axis=-1, keepdims=True), 1e-12)


def _ce_ref(logits, ls=0.0):
    n = logits.shape[0]
    logp = jax.nn.log_softmax(logits, axis=-1)
    nll = -logp[jnp.arange(n), jnp.arange(n)]
    smooth = -jnp.mean(logp, axis=-1)
    return jnp.mean((1.0 - ls) * nll + ls * smooth)


def _barlip_ref(z1, z2, lamb, scale):
    n, d = z1.shape
    corr = z1.T @ z2 / n
    eye = jnp.eye(d)
    cdif = (corr - eye) ** 2
    cdif = jnp.where(eye > 0, cdif, cdif * lamb)
    return scale * jnp.sum(cdif)


def _reference(outputs, mod: BarLIPLoss):
    bl = _barlip_ref(outputs["v_image"], outputs["v_text"], mod.lamb, mod.scale_loss)
    n = 1
    for vi in outputs["v_image_local"]:
        for vt in outputs["v_text_local"]:
            bl = bl + _barlip_ref(vi, vt, mod.lamb, mod.scale_loss)
            n += 1
    bl = bl / n

    z_i = _normalize_ref(outputs["z_image_global"])
    z_t = _normalize_ref(outputs["z_text_global"])
    h_i = [_normalize_ref(h) for h in outputs["h_image_local"]]
    h_t = [_normalize_ref(h) for h in outputs["h_text_local"]]
    ls_g, ls_h = outputs["logit_scale"], outputs["h_logit_scale"]
    num_augs = len(h_i)

    g_img = _ce_ref(ls_g * z_i @ z_t.T)
    g_txt = _ce_ref(ls_g * z_t @ z_i.T)
    l_img = l_txt = 0.0
    if num_augs > 0:
        img_l, txt_l = [], []
        for i in range(num_augs):
            img_l += [_ce_ref(ls_h * h @ h_t[i].T, mod.label_smoothing) for h in h_i]
            txt_l += [_ce_ref(ls_h * h @ h_i[i].T, mod.label_smoothing) for h in h_t]
        l_img = sum(img_l) / len(img_l)
        l_txt = sum(txt_l) / len(txt_l)
    ci = (g_img + l_img * num_augs) / (1 + num_augs)
    ct = (g_txt + l_txt * num_augs) / (1 + num_augs)
    clip = (ci + ct) / 2
    total = clip * (2 if mod.loss_avg_or_sum == "sum" else 1)
    return {"loss": bl + total, "barlip_loss": bl, "clip_loss": clip}


# ----------------------------------------------------------------------------
if __name__ == "__main__":
    B, D, DV, NUM_AUGS, NUM_VLOCAL = 8, 128, 128, 2, 2

    key = jax.random.PRNGKey(0)
    keys = jax.random.split(key, 16)
    k = iter(keys)

    outputs = {
        "z_image_global": jax.random.normal(next(k), (B, D), jnp.float32),
        "z_text_global": jax.random.normal(next(k), (B, D), jnp.float32),
        "h_image_local": [
            jax.random.normal(next(k), (B, D), jnp.float32) for _ in range(NUM_AUGS)
        ],
        "h_text_local": [
            jax.random.normal(next(k), (B, D), jnp.float32) for _ in range(NUM_AUGS)
        ],
        "v_image": jax.random.normal(next(k), (B, DV), jnp.float32),
        "v_text": jax.random.normal(next(k), (B, DV), jnp.float32),
        "v_image_local": [
            jax.random.normal(next(k), (B, DV), jnp.float32) for _ in range(NUM_VLOCAL)
        ],
        "v_text_local": [
            jax.random.normal(next(k), (B, DV), jnp.float32) for _ in range(NUM_VLOCAL)
        ],
        "logit_scale": jnp.float32(10.0),
        "h_logit_scale": jnp.float32(5.0),
    }

    mod = BarLIPLoss(loss_avg_or_sum="avg", label_smoothing=0.1)
    result = mod(outputs)
    jax.block_until_ready(result["loss"])

    ref = _reference(outputs, mod)
    # bf16 MXU inputs (f32 accumulation) introduce ~1e-2 absolute error vs the f32 reference.
    for name in ("loss", "barlip_loss", "clip_loss"):
        np.testing.assert_allclose(
            np.asarray(result[name]), np.asarray(ref[name]), rtol=1e-2, atol=1e-2
        )

    print("KERNEL_OK")
</pallas_src>

<mosaic_0001>
module attributes {stable_mosaic.version = 11 : i64} {
  func.func @_barlip_pairs_kernel(%arg0: i32, %arg1: i32, %arg2: i32, %arg3: memref<5xi32, #tpu.memory_space<smem>>, %arg4: memref<5xi32, #tpu.memory_space<smem>>, %arg5: memref<1x8x128xbf16, #tpu.memory_space<vmem>>, %arg6: memref<1x8x128xbf16, #tpu.memory_space<vmem>>, %arg7: memref<1x1x128xf32, #tpu.memory_space<vmem>>, %arg8: memref<1x128xf32, #tpu.memory_space<vmem>>) attributes {dimension_semantics = [#tpu.dimension_semantics<parallel>, #tpu.dimension_semantics<arbitrary>, #tpu.dimension_semantics<arbitrary>], iteration_bounds = array<i64: 5, 1, 1>, scalar_prefetch = 2 : i64, scratch_operands = 1 : i64, tpu.core_type = #tpu.core_type<tc>, window_params = [{transform_indices = @transform_0, window_bounds = array<i64: 1, 8, 128>}, {transform_indices = @transform_1, window_bounds = array<i64: 1, 8, 128>}, {transform_indices = @transform_2, window_bounds = array<i64: 1, 1, 128>}]} {
    %c0_i32 = arith.constant 0 : i32
    %0 = arith.cmpi eq, %arg1, %c0_i32 : i32
    %c0_i32_0 = arith.constant 0 : i32
    %1 = arith.cmpi eq, %arg2, %c0_i32_0 : i32
    %2 = arith.andi %0, %1 : i1
    %3 = arith.extui %2 : i1 to i32
    %c0_i32_1 = arith.constant 0 : i32
    %4 = arith.cmpi ne, %3, %c0_i32_1 : i32
    scf.if %4 {
      %cst_18 = arith.constant 0.000000e+00 : f32
      %30 = vector.broadcast %cst_18 : f32 to vector<1x128xf32>
      %c0_19 = arith.constant 0 : index
      %c0_20 = arith.constant 0 : index
      %31 = vector.load %arg8[%c0_19, %c0_20] : memref<1x128xf32, #tpu.memory_space<vmem>>, vector<1x128xf32>
      tpu.vector_store %arg8[%c0_19, %c0_20], %30 {strides = array<i32>} : memref<1x128xf32, #tpu.memory_space<vmem>>, vector<1x128xf32>,
    } else {
    }
    %c0 = arith.constant 0 : index
    %c0_2 = arith.constant 0 : index
    %c0_3 = arith.constant 0 : index
    %5 = vector.load %arg5[%c0, %c0_2, %c0_3] : memref<1x8x128xbf16, #tpu.memory_space<vmem>>, vector<1x8x128xbf16>
    %6 = vector.shape_cast %5 : vector<1x8x128xbf16> to vector<8x128xbf16>
    %c0_4 = arith.constant 0 : index
    %c0_5 = arith.constant 0 : index
    %c0_6 = arith.constant 0 : index
    %7 = vector.load %arg6[%c0_4, %c0_5, %c0_6] : memref<1x8x128xbf16, #tpu.memory_space<vmem>>, vector<1x8x128xbf16>
    %8 = vector.shape_cast %7 : vector<1x8x128xbf16> to vector<8x128xbf16>
    %cst = arith.constant dense<0.000000e+00> : vector<128x128xf32>
    %9 = tpu.matmul %6, %8, %cst {dimension_numbers = #tpu.dot_dimension_numbers<[0], [0], [1], [1], [0, 1, 1, 1], [], []>} : vector<8x128xbf16>, vector<8x128xbf16>, vector<128x128xf32> -> vector<128x128xf32>
    %cst_7 = arith.constant 1.250000e-01 : f32
    %10 = vector.broadcast %cst_7 : f32 to vector<128x128xf32>
    %11 = arith.mulf %9, %10 : vector<128x128xf32>
    %c0_8 = arith.constant 0 : index
    %c0_9 = arith.constant 0 : index
    %12 = vector.load %arg8[%c0_8, %c0_9] : memref<1x128xf32, #tpu.memory_space<vmem>>, vector<1x128xf32>
    %13 = arith.mulf %11, %11 : vector<128x128xf32>
    %14 = vector.shape_cast %13 : vector<128x128xf32> to vector<1x128x128xf32>
    %cst_10 = arith.constant dense<0.000000e+00> : vector<1xf32>
    %15 = vector.multi_reduction <add>, %14, %cst_10 [1, 2] : vector<1x128x128xf32> to vector<1xf32>
    %16 = vector.shape_cast %15 : vector<1xf32> to vector<1x1x1xf32>
    %17 = vector.extract %16[0, 0, 0] : f32 from vector<1x1x1xf32>
    %cst_11 = arith.constant 5.000000e-03 : f32
    %18 = arith.mulf %cst_11, %17 : f32
    %19 = vector.broadcast %18 : f32 to vector<1x128xf32>
    %20 = arith.addf %12, %19 : vector<1x128xf32>
    %c0_12 = arith.constant 0 : index
    %c0_13 = arith.constant 0 : index
    %21 = vector.load %arg8[%c0_12, %c0_13] : memref<1x128xf32, #tpu.memory_space<vmem>>, vector<1x128xf32>
    tpu.vector_store %arg8[%c0_12, %c0_13], %20 {strides = array<i32>} : memref<1x128xf32, #tpu.memory_space<vmem>>, vector<1x128xf32>,
    %22 = arith.cmpi eq, %arg1, %arg2 : i32
    %23 = arith.extui %22 : i1 to i32
    %c0_i32_14 = arith.constant 0 : i32
    %24 = arith.cmpi ne, %23, %c0_i32_14 : i32
    scf.if %24 {
      %30 = arith.extf %6 : vector<8x128xbf16> to vector<8x128xf32>
      %31 = arith.extf %8 : vector<8x128xbf16> to vector<8x128xf32>
      %32 = arith.mulf %30, %31 : vector<8x128xf32>
      %cst_18 = arith.constant dense<0.000000e+00> : vector<128xf32>
      %33 = vector.multi_reduction <add>, %32, %cst_18 [0] : vector<8x128xf32> to vector<128xf32>
      %34 = vector.shape_cast %33 : vector<128xf32> to vector<1x128xf32>
      %cst_19 = arith.constant 1.250000e-01 : f32
      %35 = vector.broadcast %cst_19 : f32 to vector<1x128xf32>
      %36 = arith.mulf %34, %35 : vector<1x128xf32>
      %37 = arith.mulf %36, %36 : vector<1x128xf32>
      %38 = vector.shape_cast %37 : vector<1x128xf32> to vector<1x1x128xf32>
      %cst_20 = arith.constant dense<0.000000e+00> : vector<1xf32>
      %39 = vector.multi_reduction <add>, %38, %cst_20 [1, 2] : vector<1x1x128xf32> to vector<1xf32>
      %40 = vector.shape_cast %39 : vector<1xf32> to vector<1x1x1xf32>
      %41 = vector.extract %40[0, 0, 0] : f32 from vector<1x1x1xf32>
      %cst_21 = arith.constant 9.950000e-01 : f32
      %42 = arith.mulf %cst_21, %41 : f32
      %43 = vector.shape_cast %36 : vector<1x128xf32> to vector<1x1x128xf32>
      %cst_22 = arith.constant dense<0.000000e+00> : vector<1xf32>
      %44 = vector.multi_reduction <add>, %43, %cst_22 [1, 2] : vector<1x1x128xf32> to vector<1xf32>
      %45 = vector.shape_cast %44 : vector<1xf32> to vector<1x1x1xf32>
      %46 = vector.extract %45[0, 0, 0] : f32 from vector<1x1x1xf32>
      %cst_23 = arith.constant 2.000000e+00 : f32
      %47 = arith.mulf %cst_23, %46 : f32
      %48 = arith.subf %42, %47 : f32
      %c0_24 = arith.constant 0 : index
      %c0_25 = arith.constant 0 : index
      %49 = vector.load %arg8[%c0_24, %c0_25] : memref<1x128xf32, #tpu.memory_space<vmem>>, vector<1x128xf32>
      %50 = vector.broadcast %48 : f32 to vector<1x128xf32>
      %51 = arith.addf %49, %50 : vector<1x128xf32>
      %c0_26 = arith.constant 0 : index
      %c0_27 = arith.constant 0 : index
      %52 = vector.load %arg8[%c0_26, %c0_27] : memref<1x128xf32, #tpu.memory_space<vmem>>, vector<1x128xf32>
      tpu.vector_store %arg8[%c0_26, %c0_27], %51 {strides = array<i32>} : memref<1x128xf32, #tpu.memory_space<vmem>>, vector<1x128xf32>,
    } else {
    }
    %c0_i32_15 = arith.constant 0 : i32
    %25 = arith.cmpi eq, %arg1, %c0_i32_15 : i32
    %c0_i32_16 = arith.constant 0 : i32
    %26 = arith.cmpi eq, %arg2, %c0_i32_16 : i32
    %27 = arith.andi %25, %26 : i1
    %28 = arith.extui %27 : i1 to i32
    %c0_i32_17 = arith.constant 0 : i32
    %29 = arith.cmpi ne, %28, %c0_i32_17 : i32
    scf.if %29 {
      %c0_18 = arith.constant 0 : index
      %c0_19 = arith.constant 0 : index
      %30 = vector.load %arg8[%c0_18, %c0_19] : memref<1x128xf32, #tpu.memory_space<vmem>>, vector<1x128xf32>
      %cst_20 = arith.constant 1.280000e+02 : f32
      %31 = vector.broadcast %cst_20 : f32 to vector<1x128xf32>
      %32 = arith.addf %30, %31 : vector<1x128xf32>
      %cst_21 = arith.constant 2.500000e-02 : f32
      %33 = vector.broadcast %cst_21 : f32 to vector<1x128xf32>
      %34 = arith.mulf %33, %32 : vector<1x128xf32>
      %c0_22 = arith.constant 0 : index
      %c0_23 = arith.constant 0 : index
      %c0_24 = arith.constant 0 : index
      %35 = vector.load %arg7[%c0_22, %c0_23, %c0_24] : memref<1x1x128xf32, #tpu.memory_space<vmem>>, vector<1x1x128xf32>
      %36 = vector.shape_cast %35 : vector<1x1x128xf32> to vector<1x128xf32>
      %37 = vector.shape_cast %34 : vector<1x128xf32> to vector<1x1x128xf32>
      tpu.vector_store %arg7[%c0_22, %c0_23, %c0_24], %37 {strides = array<i32>} : memref<1x1x128xf32, #tpu.memory_space<vmem>>, vector<1x1x128xf32>,
    } else {
    }
    return
  }
  func.func @transform_0(%arg0: i32, %arg1: i32, %arg2: i32, %arg3: memref<5xi32, #tpu.memory_space<smem>>, %arg4: memref<5xi32, #tpu.memory_space<smem>>) -> (i32, i32, i32) {
    %0 = arith.index_cast %arg0 : i32 to index
    %1 = memref.load %arg3[%0] : memref<5xi32, #tpu.memory_space<smem>>
    %c0_i32 = arith.constant 0 : i32
    %c0_i32_0 = arith.constant 0 : i32
    return %1, %c0_i32, %arg1 : i32, i32, i32
  }
  func.func @transform_1(%arg0: i32, %arg1: i32, %arg2: i32, %arg3: memref<5xi32, #tpu.memory_space<smem>>, %arg4: memref<5xi32, #tpu.memory_space<smem>>) -> (i32, i32, i32) {
    %0 = arith.index_cast %arg0 : i32 to index
    %1 = memref.load %arg4[%0] : memref<5xi32, #tpu.memory_space<smem>>
    %c0_i32 = arith.constant 0 : i32
    %c0_i32_0 = arith.constant 0 : i32
    return %1, %c0_i32, %arg2 : i32, i32, i32
  }
  func.func @transform_2(%arg0: i32, %arg1: i32, %arg2: i32, %arg3: memref<5xi32, #tpu.memory_space<smem>>, %arg4: memref<5xi32, #tpu.memory_space<smem>>) -> (i32, i32, i32) {
    %c0_i32 = arith.constant 0 : i32
    %c0_i32_0 = arith.constant 0 : i32
    %c0_i32_1 = arith.constant 0 : i32
    return %arg0, %c0_i32, %c0_i32_0 : i32, i32, i32
  }
}

</mosaic_0001>

<llo_original>
// kernel: tpu_custom_call.1
$region0: #{tpu_custom_call.1}
  #allocation0 [shape = 'u32[]', space=smem, size = 0x4, offset = 0x4, fixed_abs, tag = 'smem constant byte address 0x4 - core index']
  #allocation1 [shape = 'u32[144,128]{1,0:T(1,128)}', space=vmem, size = 0x12000, scoped, tag = 'internal scratch']
  #allocation2 [shape = 'f32[1,128]{1,0:T(1,128)}', space=vmem, size = 0x200, scoped, tag = 'scratch operand']
  #allocation3 [shape = 's32[1]{0}', space=sflag, size = 0x4, scoped, tag = 'scoped memory for tpu_custom_call.1']
  #allocation4 [shape = 'u8[512]{0}', space=smem, size = 0x200, scoped, tag = 'prefetched SMEM operand 0']
  #allocation5 [shape = 'u8[512]{0}', space=smem, size = 0x200, scoped, tag = 'prefetched SMEM operand 1']
  %s0 = inlined_call_operand.hbm [shape: s32[5], index: 0, kind: input, shape index: {}]
  %s1 = inlined_call_operand.vmem [shape: s32[5], index: 1, kind: input, shape index: {}]
  %s2 = inlined_call_operand.hbm [shape: bf16[3,8,128], index: 2, kind: input, shape index: {}]
  %s3 = inlined_call_operand.hbm [shape: bf16[3,8,128], index: 3, kind: input, shape index: {}]
  %s4 = inlined_call_operand.hbm [shape: f32[5,1,128], index: 4, kind: output, shape index: {}]
  %s5 = sld [smem:[#allocation0]]
  $region61: #{tpu_custom_call.1} parent=0
    _
  %s7 = ssub.s32 1, %s5
  %s8 = scalar_select 0, %s7, %s5
  %10 = dma.hbm_to_smem %s0, 16, [#allocation4], [#allocation3]
  %s11 = sshll.u32 %s1, 4
  %s12 = int_to_ptr.vmem [resolvable:$true] %s11
  %14 = dma.vmem_to_smem %s12, 16, [#allocation5], [#allocation3]
  %15 = dma.done [#allocation3], 32
  %16 = sfence
  $region1: #{tpu_custom_call.1} parent=0
    #allocation6 [shape = 'u8[4096]{0}', space=vmem, size = 0x1000, scoped, tag = 'input window, operand 2']
    #allocation7 [shape = 's32[2]{0}', space=sflag, size = 0x8, scoped, tag = 'scoped memory for tpu_custom_call.1']
    #allocation8 [shape = 's32[2]{0}', space=sflag, size = 0x8, scoped, tag = 'scoped memory for tpu_custom_call.1']
    #allocation9 [shape = 'u8[4096]{0}', space=vmem, size = 0x1000, scoped, tag = 'input window, operand 3']
    #allocation10 [shape = 's32[2]{0}', space=sflag, size = 0x8, scoped, tag = 'scoped memory for tpu_custom_call.1']
    #allocation11 [shape = 'u8[1024]{0}', space=vmem, size = 0x400, scoped, tag = 'output window, operand 0']
    %17 = vsyncpa [#allocation7], 0
    %s18 = scalar_lea.sflag [#allocation7], 1
    %19 = vsyncpa %s18, 0
    %20 = vsyncpa [#allocation10], 0
    %s21 = scalar_lea.sflag [#allocation10], 1
    %22 = vsyncpa %s21, 0
    %23 = vsyncpa [#allocation8], 0
    %s24 = scalar_lea.sflag [#allocation8], 1
    %25 = vsyncpa %s24, 0
    loop: start=0, step=1, limit=7
    $region2: #{tpu_custom_call.1} parent=1 // loop_pre_header
      _
    $region3: #{tpu_custom_call.1} parent=1 // loop_header
      %s27 = sphi 0, %s31
      %p28 = scmp.ge.s32.totalorder %s27, 7
      %s34 = sphi 0, %s53
      %s35 = sphi 0, %s49
      %s36 = sphi 0, %s45
      %s37 = sphi 0, %s34
      %s38 = sphi 0, %s35
      %s39 = sphi 0, %s36
      %s40 = sphi 0, %s37
      %s41 = sphi 0, %s38
      %s42 = sphi 0, %s39
      %s60 = sphi 0, %s62
      %s63 = sphi 0, %s60
      %s64 = sphi 0, %s63
      %s80 = sphi 0, %s64
      %s90 = sphi 0, %s92
      %s93 = sphi 0, %s90
      %s94 = sphi 0, %s93
      %s110 = sphi 0, %s94
      %s116 = sphi 0, %s118
      %s119 = sphi 0, %s116
      %s120 = sphi 0, %s119
      %s136 = sphi 0, %s120
    $region4: #{tpu_custom_call.1} parent=1 // loop_header_branch
      %30 = sbr.rel (%p28) target = $region8
    $region5: #{tpu_custom_call.1} parent=1 // loop_body
      %s32 = ssub.s32 %s27, 1
      %s33 = ssub.s32 %s27, 2
      %s43 = sadd.s32 1, %s36
      %p44 = scmp.ge.s32.totalorder %s43, 1
      %s45 = scalar_select %p44, 0, %s43
      %s46 = sadd.s32 1, %s35
      %s47 = scalar_select %p44, %s46, %s35
      %p48 = scmp.ge.s32.totalorder %s47, 1
      %s49 = scalar_select %p48, 0, %s47
      %s50 = sadd.s32 1, %s34
      %s51 = scalar_select %p48, %s50, %s34
      %p52 = scmp.ge.s32.totalorder %s51, 5
      %s53 = scalar_select %p52, 0, %s51
      %s54 = sld [smem:[#allocation4 + %s34]]
      %s55 = sld [smem:[#allocation4 + %s53]]
      %s56 = ssub.s32 %s54, %s55
      %s57 = ssub.s32 %s35, %s49
      %s58 = sor.u32 %s56, %s57
      %p59 = scmp.eq.s32.totalorder %s58, 0
      %s61 = sadd.s32 %s60, 1
      %s62 = scalar_select %p59, %s60, %s61
      %p65 = pneg %p59
      %p66 = scmp.eq.s32.totalorder %s27, 4
      %p67 = por %p65, %p66
      %p68 = scmp.ne.s32.totalorder %s60, %s63
      %p69 = scmp.eq.s32.totalorder %s27, 0
      %p70 = por %p68, %p69
      %p71 = scmp.ne.s32.totalorder %s60, %s63
      %p72 = scmp.eq.s32.totalorder %s32, 4
      %p73 = por %p71, %p72
      %p74 = scmp.ne.s32.totalorder %s63, %s64
      %p75 = scmp.eq.s32.totalorder %s32, 0
      %p76 = por %p74, %p75
      %p77 = scmp.ne.s32.totalorder %s63, %s64
      %p78 = scmp.eq.s32.totalorder %s33, 4
      %p79 = por %p77, %p78
      %p81 = scmp.ne.s32.totalorder %s64, %s80
      %p82 = scmp.eq.s32.totalorder %s33, 0
      %p83 = por %p81, %p82
      %s84 = sld [smem:[#allocation5 + %s34]]
      %s85 = sld [smem:[#allocation5 + %s53]]
      %s86 = ssub.s32 %s84, %s85
      %s87 = ssub.s32 %s36, %s45
      %s88 = sor.u32 %s86, %s87
      %p89 = scmp.eq.s32.totalorder %s88, 0
      %s91 = sadd.s32 %s90, 1
      %s92 = scalar_select %p89, %s90, %s91
      %p95 = pneg %p89
      %p96 = scmp.eq.s32.totalorder %s27, 4
      %p97 = por %p95, %p96
      %p98 = scmp.ne.s32.totalorder %s90, %s93
      %p99 = scmp.eq.s32.totalorder %s27, 0
      %p100 = por %p98, %p99
      %p101 = scmp.ne.s32.totalorder %s90, %s93
      %p102 = scmp.eq.s32.totalorder %s32, 4
      %p103 = por %p101, %p102
      %p104 = scmp.ne.s32.totalorder %s93, %s94
      %p105 = scmp.eq.s32.totalorder %s32, 0
      %p106 = por %p104, %p105
      %p107 = scmp.ne.s32.totalorder %s93, %s94
      %p108 = scmp.eq.s32.totalorder %s33, 4
      %p109 = por %p107, %p108
      %p111 = scmp.ne.s32.totalorder %s94, %s110
      %p112 = scmp.eq.s32.totalorder %s33, 0
      %p113 = por %p111, %p112
      %s114 = ssub.s32 %s34, %s53
      %p115 = scmp.eq.s32.totalorder %s114, 0
      %s117 = sadd.s32 %s116, 1
      %s118 = scalar_select %p115, %s116, %s117
      %p121 = pneg %p115
      %p122 = scmp.eq.s32.totalorder %s27, 4
      %p123 = por %p121, %p122
      %p124 = scmp.ne.s32.totalorder %s116, %s119
      %p125 = scmp.eq.s32.totalorder %s27, 0
      %p126 = por %p124, %p125
      %p127 = scmp.ne.s32.totalorder %s116, %s119
      %p128 = scmp.eq.s32.totalorder %s32, 4
      %p129 = por %p127, %p128
      %p130 = scmp.ne.s32.totalorder %s119, %s120
      %p131 = scmp.eq.s32.totalorder %s32, 0
      %p132 = por %p130, %p131
      %p133 = scmp.ne.s32.totalorder %s119, %s120
      %p134 = scmp.eq.s32.totalorder %s33, 4
      %p135 = por %p133, %p134
      %p137 = scmp.ne.s32.totalorder %s120, %s136
      %p138 = scmp.eq.s32.totalorder %s33, 0
      %p139 = por %p137, %p138
      %p140 = scmp.le.s32.totalorder 1, %s27
      %p141 = scmp.lt.s32.totalorder %s27, 6
      %p142 = pnand %p140, %p141
      %p143 = pneg %p142
      // Predicated region
      $region9: #{tpu_custom_call.1} parent=5 // pred_check
        _
      $region10: #{tpu_custom_call.1} parent=5 // pred_check_branch
        %145 = sbr.rel (%p142) target = $region12
      $region11: #{tpu_custom_call.1} parent=5 // pred_region
        %s146 = ssub.s32 %s27, 1
      $region12: #{tpu_custom_call.1} parent=5 // pred_fallthru
        _
      %p147 = scmp.lt.s32.totalorder %s27, 5
      // Predicated region
      $region13: #{tpu_custom_call.1} parent=5 // pred_check
        %p148 = pneg %p147
      $region14: #{tpu_custom_call.1} parent=5 // pred_check_branch
        %150 = sbr.rel (%p148) target = $region16
      $region15: #{tpu_custom_call.1} parent=5 // pred_region
        // Predicated region
        $region17: #{tpu_custom_call.1} parent=15 // pred_check
          %p151 = pneg %p70
        $region18: #{tpu_custom_call.1} parent=15 // pred_check_branch
          %153 = sbr.rel (%p151) target = $region20
        $region19: #{tpu_custom_call.1} parent=15 // pred_region
          %s154 = sand.u32 %s60, 1
          %s155 = scalar_lea.sflag [#allocation7], %s154
          %s156 = sand.u32 %s60, 1
          %s157 = smul.addr %s156, 4
          %s158 = scalar_lea.vmem [#allocation6], %s157
          %s159 = sld [smem:[#allocation4 + %s34]]
          %s161 = ssub.s32 64, 64
          %162 = vsyncadd %s155, %s161
          %s163 = sadd.s32 %s35, %s159
          %s164 = smul.addr %s163, 64
          %s165 = scalar_lea.hbm %s2, %s164
          %s167 = sshll.u32 %s158, 4
          %s168 = int_to_ptr.vmem [resolvable:$true] %s167
          %170 = dma.hbm_to_vmem [thread:$0]  %s165, 64, %s168, %s155
        $region20: #{tpu_custom_call.1} parent=15 // pred_fallthru
          _
        // Predicated region
        $region21: #{tpu_custom_call.1} parent=15 // pred_check
          %p171 = pneg %p100
        $region22: #{tpu_custom_call.1} parent=15 // pred_check_branch
          %173 = sbr.rel (%p171) target = $region24
        $region23: #{tpu_custom_call.1} parent=15 // pred_region
          %s174 = sand.u32 %s90, 1
          %s175 = scalar_lea.sflag [#allocation10], %s174
          %s176 = sand.u32 %s90, 1
          %s177 = smul.addr %s176, 4
          %s178 = scalar_lea.vmem [#allocation9], %s177
          %s179 = sld [smem:[#allocation5 + %s34]]
          %s181 = ssub.s32 64, 64
          %182 = vsyncadd %s175, %s181
          %s183 = sadd.s32 %s36, %s179
          %s184 = smul.addr %s183, 64
          %s185 = scalar_lea.hbm %s3, %s184
          %s187 = sshll.u32 %s178, 4
          %s188 = int_to_ptr.vmem [resolvable:$true] %s187
          %190 = dma.hbm_to_vmem [thread:$0]  %s185, 64, %s188, %s175
        $region24: #{tpu_custom_call.1} parent=15 // pred_fallthru
          _
      $region16: #{tpu_custom_call.1} parent=5 // pred_fallthru
        _
      %p191 = scmp.le.s32.totalorder 1, %s27
      %p192 = scmp.lt.s32.totalorder %s27, 6
      %p193 = pnand %p191, %p192
      %p194 = pneg %p193
      // Predicated region
      $region25: #{tpu_custom_call.1} parent=5 // pred_check
        _
      $region26: #{tpu_custom_call.1} parent=5 // pred_check_branch
        %196 = sbr.rel (%p193) target = $region28
      $region27: #{tpu_custom_call.1} parent=5 // pred_region
        %s197 = ssub.s32 %s27, 1
        %s198 = sand.u32 %s63, 1
        %s199 = scalar_lea.sflag [#allocation7], %s198
        %s200 = sand.u32 %s63, 1
        %s201 = smul.addr %s200, 4
        %s202 = scalar_lea.vmem [#allocation6], %s201
        // Predicated region
        $region29: #{tpu_custom_call.1} parent=27 // pred_check
          %p203 = pneg %p76
        $region30: #{tpu_custom_call.1} parent=27 // pred_check_branch
          %205 = sbr.rel (%p203) target = $region32
        $region31: #{tpu_custom_call.1} parent=27 // pred_region
          %206 = dma.done %s199, 64
        $region32: #{tpu_custom_call.1} parent=27 // pred_fallthru
          _
        %s207 = sand.u32 %s93, 1
        %s208 = scalar_lea.sflag [#allocation10], %s207
        %s209 = sand.u32 %s93, 1
        %s210 = smul.addr %s209, 4
        %s211 = scalar_lea.vmem [#allocation9], %s210
        // Predicated region
        $region33: #{tpu_custom_call.1} parent=27 // pred_check
          %p212 = pneg %p106
        $region34: #{tpu_custom_call.1} parent=27 // pred_check_branch
          %214 = sbr.rel (%p212) target = $region36
        $region35: #{tpu_custom_call.1} parent=27 // pred_region
          %215 = dma.done %s208, 64
        $region36: #{tpu_custom_call.1} parent=27 // pred_fallthru
          _
        %s216 = sand.u32 %s63, 1
        %s217 = scalar_lea.sflag [#allocation7], %s216
        %s218 = sand.u32 %s63, 1
        %s219 = smul.addr %s218, 4
        %s220 = scalar_lea.vmem [#allocation6], %s219
        %p221 = pneg %p76
        %p222 = pneg %p73
        %s223 = sand.u32 %s93, 1
        %s224 = scalar_lea.sflag [#allocation10], %s223
        %s225 = sand.u32 %s93, 1
        %s226 = smul.addr %s225, 4
        %s227 = scalar_lea.vmem [#allocation9], %s226
        %p228 = pneg %p106
        %p229 = pneg %p103
        %p230 = pneg %p132
        %p231 = pneg %p129
        %s232 = sand.u32 %s119, 1
        %s233 = scalar_lea.sflag [#allocation8], %s232
        %s234 = sand.u32 %s119, 1
        %s235 = scalar_lea.vmem [#allocation11], %s234
        %s236 = sld [smem:[#allocation4 + %s37]]
        %s237 = sld [smem:[#allocation5 + %s37]]
        %p239 = scmp.eq.s32.totalorder %s38, 0
        %p240 = scmp.eq.s32.totalorder %s39, 0
        %p241 = pnand %p239, %p240
        %p242 = pneg %p241
        // Predicated region
        $region37: #{tpu_custom_call.1} parent=27 // pred_check
          _
        $region38: #{tpu_custom_call.1} parent=27 // pred_check_branch
          %244 = sbr.rel (%p241) target = $region40
        $region39: #{tpu_custom_call.1} parent=27 // pred_region
          %245 = vst [vmem:[#allocation2] sm:$0x1] 0.0
        $region40: #{tpu_custom_call.1} parent=27 // pred_fallthru
          _
        %v246 = vld [vmem:[%s202] sm:$0xf]
        %v247 = vld [vmem:[%s211] sm:$0xf]
        %248 = vxpose.xlu0.c.b16.start [1/8] %v246, 128
        %249 = vxpose.xlu0.c.b16.cont [2/8] 0, 128
        %250 = vxpose.xlu0.c.b16.cont [3/8] 0, 128
        %251 = vxpose.xlu0.c.b16.cont [4/8] 0, 128
        %252 = vxpose.xlu0.c.b16.cont [5/8] 0, 128
        %253 = vxpose.xlu0.c.b16.cont [6/8] 0, 128
        %254 = vxpose.xlu0.c.b16.cont [7/8] 0, 128
        %255 = vxpose.xlu0.c.b16.end [8/8] 0, 128
        %v256 = vpop.trf.xlu0
        %v257 = vpop.trf.xlu0
        %v258 = vpop.trf.xlu0
        %v259 = vpop.trf.xlu0
        %v260 = vpop.trf.xlu0
        %v261 = vpop.trf.xlu0
        %v262 = vpop.trf.xlu0
        %v263 = vpop.trf.xlu0
        %vm264 = vcmask 64512
        %v266 = vsel %vm264, %v256, 0
        %v269 = vsel %vm264, %v257, 0
        %v272 = vsel %vm264, %v258, 0
        %v275 = vsel %vm264, %v259, 0
        %v278 = vsel %vm264, %v260, 0
        %v281 = vsel %vm264, %v261, 0
        %v284 = vsel %vm264, %v262, 0
        %v287 = vsel %vm264, %v263, 0
        %vm289 = vcmask 1043456
        %v291 = vsel %vm289, %v247, 0
        %293 = vmatprep.subr.bf16.mxu0 0
        %294 = vmatpush1.bf16.msra.mxu0 0
        %295 = vmatprep.subr.bf16.mxu0 0
        %296 = vmatpush1.bf16.msra.mxu0 0
        %297 = vmatprep.subr.bf16.mxu0 0
        %298 = vmatpush1.bf16.msra.mxu0 0
        %299 = vmatprep.subr.bf16.mxu0 0
        %300 = vmatpush1.bf16.msra.mxu0 0
        %301 = vmatprep.subr.bf16.mxu0 0
        %302 = vmatpush1.bf16.msra.mxu0 0
        %303 = vmatprep.subr.bf16.mxu0 0
        %304 = vmatpush1.bf16.msra.mxu0 0
        %305 = vmatprep.subr.bf16.mxu0 0
        %306 = vmatpush1.bf16.msra.mxu0 0
        %307 = vmatprep.subr.bf16.mxu0 0
        %308 = vmatpush1.bf16.msra.mxu0 %v291
        %309 = vmatprep.subr.bf16.mxu0 0
        %310 = vmatpush2.bf16.msra.mxu0 0
        %311 = vmatprep.subr.bf16.mxu0 0
        %312 = vmatpush2.bf16.msra.mxu0 0
        %313 = vmatprep.subr.bf16.mxu0 0
        %314 = vmatpush2.bf16.msra.mxu0 0
        %315 = vmatprep.subr.bf16.mxu0 0
        %316 = vmatpush2.bf16.msra.mxu0 0
        %317 = vmatprep.subr.bf16.mxu0 0
        %318 = vmatpush2.bf16.msra.mxu0 0
        %319 = vmatprep.subr.bf16.mxu0 0
        %320 = vmatpush2.bf16.msra.mxu0 0
        %321 = vmatprep.subr.bf16.mxu0 0
        %322 = vmatpush2.bf16.msra.mxu0 0
        %323 = vmatprep.subr.bf16.mxu0 0
        %324 = vmatpush2.bf16.msra.mxu0 0
        %325 = vmatprep.mubr.bf16.mxu0 0
        %326 = vmatmul.mubr.bf16.gmra.mxu0 %v266
        %v327 = vpop.f32.mrf.mxu0
        %v328 = vadd.f32 0.0, %v327
        %v329 = vpop.f32.mrf.mxu0
        %v330 = vpop.f32.mrf.mxu0
        %v331 = vadd.f32 0.0, %v330
        %v332 = vpop.f32.mrf.mxu0
        %333 = vmatprep.mubr.bf16.mxu0 0
        %334 = vmatmul.mubr.bf16.gmra.mxu0 %v269
        %v335 = vpop.f32.mrf.mxu0
        %v336 = vadd.f32 0.0, %v335
        %v337 = vpop.f32.mrf.mxu0
        %v338 = vpop.f32.mrf.mxu0
        %v339 = vadd.f32 0.0, %v338
        %v340 = vpop.f32.mrf.mxu0
        %341 = vmatprep.mubr.bf16.mxu0 0
        %342 = vmatmul.mubr.bf16.gmra.mxu0 %v272
        %v343 = vpop.f32.mrf.mxu0
        %v344 = vadd.f32 0.0, %v343
        %v345 = vpop.f32.mrf.mxu0
        %v346 = vpop.f32.mrf.mxu0
        %v347 = vadd.f32 0.0, %v346
        %v348 = vpop.f32.mrf.mxu0
        %349 = vmatprep.mubr.bf16.mxu0 0
        %350 = vmatmul.mubr.bf16.gmra.mxu0 %v275
        %v351 = vpop.f32.mrf.mxu0
        %v352 = vadd.f32 0.0, %v351
        %v353 = vpop.f32.mrf.mxu0
        %v354 = vpop.f32.mrf.mxu0
        %v355 = vadd.f32 0.0, %v354
        %v356 = vpop.f32.mrf.mxu0
        %357 = vmatprep.mubr.bf16.mxu0 0
        %358 = vmatmul.mubr.bf16.gmra.mxu0 %v278
        %v359 = vpop.f32.mrf.mxu0
        %v360 = vadd.f32 0.0, %v359
        %v361 = vpop.f32.mrf.mxu0
        %v362 = vpop.f32.mrf.mxu0
        %v363 = vadd.f32 0.0, %v362
        %v364 = vpop.f32.mrf.mxu0
        %365 = vmatprep.mubr.bf16.mxu0 0
        %366 = vmatmul.mubr.bf16.gmra.mxu0 %v281
        %v367 = vpop.f32.mrf.mxu0
        %v368 = vadd.f32 0.0, %v367
        %v369 = vpop.f32.mrf.mxu0
        %v370 = vpop.f32.mrf.mxu0
        %v371 = vadd.f32 0.0, %v370
        %v372 = vpop.f32.mrf.mxu0
        %373 = vmatprep.mubr.bf16.mxu0 0
        %374 = vmatmul.mubr.bf16.gmra.mxu0 %v284
        %v375 = vpop.f32.mrf.mxu0
        %v376 = vadd.f32 0.0, %v375
        %v377 = vpop.f32.mrf.mxu0
        %v378 = vpop.f32.mrf.mxu0
        %v379 = vadd.f32 0.0, %v378
        %v380 = vpop.f32.mrf.mxu0
        %381 = vmatprep.mubr.bf16.mxu0 0
        %382 = vmatmul.mubr.bf16.gmra.mxu0 %v287
        %v383 = vpop.f32.mrf.mxu0
        %v384 = vadd.f32 0.0, %v383
        %v385 = vpop.f32.mrf.mxu0
        %v386 = vpop.f32.mrf.mxu0
        %v387 = vadd.f32 0.0, %v386
        %v388 = vpop.f32.mrf.mxu0
        %389 = vdwg.mxu0
        %v390 = vmul.f32 %v328, 0.125
        %v391 = vmul.f32 %v331, 0.125
        %v392 = vmul.f32 %v336, 0.125
        %v393 = vmul.f32 %v339, 0.125
        %v394 = vmul.f32 %v344, 0.125
        %v395 = vmul.f32 %v347, 0.125
        %v396 = vmul.f32 %v352, 0.125
        %v397 = vmul.f32 %v355, 0.125
        %v398 = vmul.f32 %v360, 0.125
        %v399 = vmul.f32 %v363, 0.125
        %v400 = vmul.f32 %v368, 0.125
        %v401 = vmul.f32 %v371, 0.125
        %v402 = vmul.f32 %v376, 0.125
        %v403 = vmul.f32 %v379, 0.125
        %v404 = vmul.f32 %v384, 0.125
        %v405 = vmul.f32 %v387, 0.125
        %v406 = vld [vmem:[#allocation2] sm:$0x1]
        %v407 = vmul.f32 %v390, %v390
        %v408 = vmul.f32 %v391, %v391
        %v409 = vmul.f32 %v392, %v392
        %v410 = vmul.f32 %v393, %v393
        %v411 = vmul.f32 %v394, %v394
        %v412 = vmul.f32 %v395, %v395
        %v413 = vmul.f32 %v396, %v396
        %v414 = vmul.f32 %v397, %v397
        %v415 = vmul.f32 %v398, %v398
        %v416 = vmul.f32 %v399, %v399
        %v417 = vmul.f32 %v400, %v400
        %v418 = vmul.f32 %v401, %v401
        %v419 = vmul.f32 %v402, %v402
        %v420 = vmul.f32 %v403, %v403
        %v421 = vmul.f32 %v404, %v404
        %v422 = vmul.f32 %v405, %v405
        %v423 = vadd.f32 %v407, %v408
        %v424 = vadd.f32 %v423, %v409
        %v425 = vadd.f32 %v424, %v410
        %v426 = vadd.f32 %v425, %v411
        %v427 = vadd.f32 %v426, %v412
        %v428 = vadd.f32 %v427, %v413
        %v429 = vadd.f32 %v428, %v414
        %v430 = vadd.f32 %v429, %v415
        %v431 = vadd.f32 %v430, %v416
        %v432 = vadd.f32 %v431, %v417
        %v433 = vadd.f32 %v432, %v418
        %v434 = vadd.f32 %v433, %v419
        %v435 = vadd.f32 %v434, %v420
        %v436 = vadd.f32 %v435, %v421
        %v437 = vadd.f32 %v436, %v422
        %438 = vadd.xlane.f32.xlu0 %v437
        %v439 = vpop.xlane.xlu0 %438
        %v440 = vrot.slane %v439, 4
        %v441 = vadd.f32 %v439, %v440
        %v442 = vrot.slane %v441, 2
        %v443 = vadd.f32 %v441, %v442
        %v444 = vrot.slane %v443, 1
        %v445 = vadd.f32 %v443, %v444
        %s446 = vtos %v445
        %s447 = smul.f32 %s446, 0.005
        %v448 = vstv %s447
        %v449 = vadd.f32 %v406, %v448
        %450 = vst [vmem:[#allocation2] sm:$0x1] %v449
        %p451 = scmp.eq.s32.totalorder %s38, %s39
        // Predicated region
        $region41: #{tpu_custom_call.1} parent=27 // pred_check
          %p452 = pneg %p451
        $region42: #{tpu_custom_call.1} parent=27 // pred_check_branch
          %454 = sbr.rel (%p452) target = $region44
        $region43: #{tpu_custom_call.1} parent=27 // pred_region
          %v455 = vunpack.c.l.bf16 %v246
          %v456 = vunpack.c.l.bf16 %v247
          %v457 = vmul.f32 %v455, %v456
          %v458 = vrot.slane %v457, 4
          %v459 = vadd.f32 %v457, %v458
          %v460 = vrot.slane %v459, 2
          %v461 = vadd.f32 %v459, %v460
          %v462 = vrot.slane %v461, 1
          %v463 = vadd.f32 %v461, %v462
          %v464 = vmul.f32 %v463, 0.125
          %v465 = vmul.f32 %v464, %v464
          %vm466 = vcmask 1040384
          %v467 = vsel %vm466, %v465, 0.0
          %468 = vadd.xlane.f32.xlu0 %v467
          %v469 = vpop.xlane.xlu0 %468
          %v470 = vrot.slane %v469, 4
          %v471 = vadd.f32 %v469, %v470
          %v472 = vrot.slane %v471, 2
          %v473 = vadd.f32 %v471, %v472
          %v474 = vrot.slane %v473, 1
          %v475 = vadd.f32 %v473, %v474
          %s476 = vtos %v475
          %s477 = smul.f32 %s476, 0.995
          %v478 = vsel %vm466, %v464, 0.0
          %479 = vadd.xlane.f32.xlu0 %v478
          %v480 = vpop.xlane.xlu0 %479
          %v481 = vrot.slane %v480, 4
          %v482 = vadd.f32 %v480, %v481
          %v483 = vrot.slane %v482, 2
          %v484 = vadd.f32 %v482, %v483
          %v485 = vrot.slane %v484, 1
          %v486 = vadd.f32 %v484, %v485
          %s487 = vtos %v486
          %s488 = smul.f32 %s487, 2.0
          %s489 = ssub.f32 %s477, %s488
          %v490 = vld [vmem:[#allocation2] sm:$0x1]
          %v491 = vstv %s489
          %v492 = vadd.f32 %v490, %v491
          %493 = vst [vmem:[#allocation2] sm:$0x1] %v492
        $region44: #{tpu_custom_call.1} parent=27 // pred_fallthru
          _
        // Predicated region
        $region45: #{tpu_custom_call.1} parent=27 // pred_check
          _
        $region46: #{tpu_custom_call.1} parent=27 // pred_check_branch
          %495 = sbr.rel (%p241) target = $region48
        $region47: #{tpu_custom_call.1} parent=27 // pred_region
          %v496 = vld [vmem:[#allocation2] sm:$0x1]
          %v497 = vadd.f32 %v496, 128.0
          %v498 = vmul.f32 %v497, 0.025
          %499 = vst [vmem:[%s235] sm:$0x1] %v498
        $region48: #{tpu_custom_call.1} parent=27 // pred_fallthru
          _
        %s500 = sand.u32 %s119, 1
        %s501 = scalar_lea.sflag [#allocation8], %s500
        %s502 = sand.u32 %s119, 1
        %s503 = scalar_lea.vmem [#allocation11], %s502
        // Predicated region
        $region49: #{tpu_custom_call.1} parent=27 // pred_check
          %p504 = pneg %p129
        $region50: #{tpu_custom_call.1} parent=27 // pred_check_branch
          %506 = sbr.rel (%p504) target = $region52
        $region51: #{tpu_custom_call.1} parent=27 // pred_region
          %s508 = ssub.s32 16, 16
          %509 = vsyncadd %s501, %s508
          %s510 = smul.addr %s37, 16
          %s511 = scalar_lea.hbm %s4, %s510
          %s513 = sshll.u32 %s503, 4
          %s514 = int_to_ptr.vmem [resolvable:$true] %s513
          %516 = dma.vmem_to_hbm [thread:$0]  %s514, 16, %s511, %s501
        $region52: #{tpu_custom_call.1} parent=27 // pred_fallthru
          _
      $region28: #{tpu_custom_call.1} parent=5 // pred_fallthru
        _
      %p517 = scmp.le.s32.totalorder 2, %s27
      // Predicated region
      $region53: #{tpu_custom_call.1} parent=5 // pred_check
        %p518 = pneg %p517
      $region54: #{tpu_custom_call.1} parent=5 // pred_check_branch
        %520 = sbr.rel (%p518) target = $region56
      $region55: #{tpu_custom_call.1} parent=5 // pred_region
        %s521 = ssub.s32 %s27, 2
        // Predicated region
        $region57: #{tpu_custom_call.1} parent=55 // pred_check
          %p522 = pneg %p135
        $region58: #{tpu_custom_call.1} parent=55 // pred_check_branch
          %524 = sbr.rel (%p522) target = $region60
        $region59: #{tpu_custom_call.1} parent=55 // pred_region
          %s525 = sand.u32 %s120, 1
          %s526 = scalar_lea.sflag [#allocation8], %s525
          %s527 = sand.u32 %s120, 1
          %s528 = scalar_lea.vmem [#allocation11], %s527
          %529 = dma.done %s526, 16
        $region60: #{tpu_custom_call.1} parent=55 // pred_fallthru
          _
      $region56: #{tpu_custom_call.1} parent=5 // pred_fallthru
        _
    $region6: #{tpu_custom_call.1} parent=1 // loop_footer
      %s31 = sadd.s32 1, %s27
    $region7: #{tpu_custom_call.1} parent=1 // loop_footer_branch
      %26 = sbr.rel target = $region3
    $region8: #{tpu_custom_call.1} parent=1 // loop_exit
      _
    %530 = vsyncpa [#allocation7], 1
    %s531 = scalar_lea.sflag [#allocation7], 1
    %532 = vsyncpa %s531, 1
    %533 = vsyncpa [#allocation10], 1
    %s534 = scalar_lea.sflag [#allocation10], 1
    %535 = vsyncpa %s534, 1
    %536 = vsyncpa [#allocation8], 1
    %s537 = scalar_lea.sflag [#allocation8], 1
    %538 = vsyncpa %s537, 1

</llo_original>
